<compile_context>
chip_gen: v6e
topology: v6e:2x2x1
jax: 0.10.0
libtpu: 0.0.40
codegen_flags: <defaults>
</compile_context>

<pallas_src>
import functools

import jax
import jax.numpy as jnp
from jax import lax
from jax.experimental import pallas as pl
from jax.experimental.pallas import tpu as pltpu

HIDDEN = 64          # fixed by the module spec
FUSED = 2 * HIDDEN   # 128 : lane-dense fused (actor | critic) activation width
OUT_W = 128          # lane-dense output slab width


def _round_up(x, m):
    return (x + m - 1) // m * m


def _cdiv(a, b):
    return -(-a // b)


def _choose_tiling(B):
    """Near-equal batch tiles: multiple of 16 rows (bf16 sublane packing),
    target ~512 rows/tile, >= 2 grid steps when B allows (2-TC sharding on
    v7x), and minimal padding (waste bounded by n_tiles * 15 rows instead of
    padding B up to a multiple of a fixed 256/512)."""
    SUB = 16
    TARGET = 512
    n = _cdiv(B, TARGET)
    if n < 2 and B > SUB:
        n = 2
    n = max(n, 1)
    b_tile = _round_up(_cdiv(B, n), SUB)
    return b_tile, n * b_tile, n


# ----------------------------- Pallas kernel ------------------------------ #

def _fused_actor_critic_kernel(state_ref, w1_ref, b1_ref, w2_ref, b2_ref,
                               w3_ref, b3_ref, out_ref, *, action_dim):
    """One grid step: [bt, S] states -> [bt, 128] bf16 output slab."""
    x = state_ref[...].astype(jnp.bfloat16)

    # Fused (actor | critic) MLP: bf16 MXU inputs, f32 accumulation, bf16 tanh
    # (EUP bf16 on v6e/v7x; bf16 output feeds the next matmul with no cast).
    h = jnp.tanh(
        (jnp.dot(x, w1_ref[...], preferred_element_type=jnp.float32)
         + b1_ref[...]).astype(jnp.bfloat16))
    h = jnp.tanh(
        (jnp.dot(h, w2_ref[...], preferred_element_type=jnp.float32)
         + b2_ref[...]).astype(jnp.bfloat16))
    fused = (jnp.dot(h, w3_ref[...], preferred_element_type=jnp.float32)
             + b3_ref[...])   # [bt, 128] f32: lanes 0..A-1 logits, lane A value, rest 0

    bt, width = fused.shape
    lane = lax.broadcasted_iota(jnp.int32, (bt, width), 1)
    act_mask = lane < action_dim

    # Masked, numerically stable log-softmax over the actor lanes (f32).
    logits = jnp.where(act_mask, fused, jnp.float32(-1e30))
    m = jnp.max(logits, axis=-1, keepdims=True)
    e = jnp.exp(logits - m)            # exactly 0 on masked lanes
    s = jnp.sum(e, axis=-1, keepdims=True)
    lse = m + jnp.log(s)
    logp = logits - lse                # finite everywhere (no inf/nan)
    p = e * pl.reciprocal(s, approx=True)            # EUP slot; tiny bias ok
    entropy = -jnp.sum(p * logp, axis=-1, keepdims=True)   # masked lanes: 0 * finite

    # Output assembly (trimmed): value lane A (and zero lanes > A+1) come
    # straight from `fused`; one final select places entropy in lane A+1.
    out = jnp.where(act_mask, logp, fused)
    out = jnp.where(lane == action_dim + 1, entropy, out)
    out_ref[...] = out.astype(out_ref.dtype)         # bf16 slab store


# ------------------------------ forward pass ------------------------------- #

@functools.partial(jax.jit, static_argnames=("action_dim",))
def _forward_jit(state, w, action_dim):
    B, S = state.shape
    b_tile, Bp, n_tiles = _choose_tiling(B)
    if Bp != B:
        state = jnp.pad(state, ((0, Bp - B), (0, 0)))

    const = lambda i: (0, 0)   # weights/biases stay VMEM-resident across steps

    # VMEM budget from actual tile sizes (double-buffered state/out tiles +
    # resident weights + headroom); never request the full v7x 64 MiB.
    vmem_need = (2 * b_tile * (S * 4 + OUT_W * 2)
                 + 2 * ((S * FUSED + FUSED * FUSED + FUSED * OUT_W) * 2
                        + 3 * OUT_W * 4)
                 + (2 << 20))
    vmem_limit = max(vmem_need, 8 << 20)

    slab = pl.pallas_call(
        functools.partial(_fused_actor_critic_kernel, action_dim=action_dim),
        out_shape=jax.ShapeDtypeStruct((Bp, OUT_W), jnp.bfloat16),
        grid_spec=pltpu.PrefetchScalarGridSpec(
            num_scalar_prefetch=0,
            grid=(n_tiles,),
            in_specs=[
                pl.BlockSpec((b_tile, S), lambda i: (i, 0)),   # state tile
                pl.BlockSpec((S, FUSED), const),               # W1 fused
                pl.BlockSpec((1, FUSED), const),               # b1 fused
                pl.BlockSpec((FUSED, FUSED), const),           # W2 fused
                pl.BlockSpec((1, FUSED), const),               # b2 fused
                pl.BlockSpec((FUSED, OUT_W), const),           # W3 fused
                pl.BlockSpec((1, OUT_W), const),               # b3 fused
            ],
            out_specs=pl.BlockSpec((b_tile, OUT_W), lambda i: (i, 0)),
        ),
        compiler_params=pltpu.CompilerParams(
            dimension_semantics=("parallel",),   # >=2 steps -> shards over TCs
            vmem_limit_bytes=vmem_limit,
        ),
    )(state, w["w1"], w["b1"], w["w2"], w["b2"], w["w3"], w["b3"])

    # Slices fuse with the cast under jit; logp/value upcast to f32 for PPO
    # ratio math.  TODO(synk): keep logp lanes in a separate f32 output if
    # importance ratios ever need more than bf16 precision.
    logp = slab[:B, :action_dim].astype(jnp.float32)
    value = slab[:B, action_dim:action_dim + 1].astype(jnp.float32)
    entropy = slab[:B, action_dim + 1].astype(jnp.float32)
    return logp, value, entropy


def actor_critic_forward(state, packed):
    """Returns (log_probs [B, A], value [B, 1], entropy [B])."""
    weights = {k: v for k, v in packed.items() if k != "action_dim"}
    return _forward_jit(state, weights, action_dim=packed["action_dim"])


# ------------------------------- parameters -------------------------------- #

def init_params(key, state_dim, action_dim, hidden=HIDDEN):
    """Raw per-layer params ([in, out] layout) mimicking nn.Linear init."""
    ks = jax.random.split(key, 12)

    def lin(kw, kb, fan_in, fan_out):
        bound = 1.0 / jnp.sqrt(jnp.float32(fan_in))
        w = jax.random.uniform(kw, (fan_in, fan_out), jnp.float32, -bound, bound)
        b = jax.random.uniform(kb, (1, fan_out), jnp.float32, -bound, bound)
        return w, b

    aw1, ab1 = lin(ks[0], ks[1], state_dim, hidden)
    aw2, ab2 = lin(ks[2], ks[3], hidden, hidden)
    aw3, ab3 = lin(ks[4], ks[5], hidden, action_dim)
    cw1, cb1 = lin(ks[6], ks[7], state_dim, hidden)
    cw2, cb2 = lin(ks[8], ks[9], hidden, hidden)
    cw3, cb3 = lin(ks[10], ks[11], hidden, 1)
    return dict(
        aw1=aw1, ab1=ab1, aw2=aw2, ab2=ab2, aw3=aw3, ab3=ab3,
        cw1=cw1, cb1=cb1, cw2=cw2, cb2=cb2, cw3=cw3, cb3=cb3,
    )


def pack_params(raw, compute_dtype=jnp.bfloat16):
    """Fuse actor+critic weights into 3 lane-dense 128-wide matrices."""
    S = raw["aw1"].shape[0]
    H = raw["aw2"].shape[0]
    A = raw["aw3"].shape[1]
    assert 2 * H == FUSED, "fusion layout assumes hidden == 64"
    assert A + 2 <= OUT_W, "action_dim too large for a 128-lane output slab"

    w1 = jnp.concatenate([raw["aw1"], raw["cw1"]], axis=1)          # [S, 128]
    b1 = jnp.concatenate([raw["ab1"], raw["cb1"]], axis=1)          # [1, 128]

    w2 = jnp.zeros((FUSED, FUSED), jnp.float32)
    w2 = w2.at[:H, :H].set(raw["aw2"]).at[H:, H:].set(raw["cw2"])   # [128, 128]
    b2 = jnp.concatenate([raw["ab2"], raw["cb2"]], axis=1)          # [1, 128]

    w3 = jnp.zeros((FUSED, OUT_W), jnp.float32)
    w3 = w3.at[:H, :A].set(raw["aw3"]).at[H:, A:A + 1].set(raw["cw3"])
    b3 = jnp.zeros((1, OUT_W), jnp.float32)
    b3 = b3.at[:, :A].set(raw["ab3"]).at[:, A:A + 1].set(raw["cb3"])

    return dict(
        w1=w1.astype(compute_dtype), b1=b1,
        w2=w2.astype(compute_dtype), b2=b2,
        w3=w3.astype(compute_dtype), b3=b3,
        action_dim=A,
    )


# ---------------------------- module-level API ------------------------------ #

def act(packed, state, key):
    """ActorCritic.act: sample action, its log-prob, state value."""
    logp, value, _ = actor_critic_forward(state, packed)
    action = jax.random.categorical(key, logp, axis=-1)      # Categorical.sample()
    action_logprob = jnp.take_along_axis(logp, action[:, None], axis=-1)[:, 0]
    return action, action_logprob, value


def evaluate(packed, state, action):
    """ActorCritic.evaluate: action log-probs, state values, entropy."""
    logp, value, entropy = actor_critic_forward(state, packed)
    action_logprobs = jnp.take_along_axis(logp, action[:, None], axis=-1)[:, 0]
    return action_logprobs, value, entropy


# ------------------------------- reference --------------------------------- #

def _reference_forward(raw, state):
    h = jnp.tanh(state @ raw["aw1"] + raw["ab1"])
    h = jnp.tanh(h @ raw["aw2"] + raw["ab2"])
    logits = h @ raw["aw3"] + raw["ab3"]
    logp = jax.nn.log_softmax(logits, axis=-1)
    g = jnp.tanh(state @ raw["cw1"] + raw["cb1"])
    g = jnp.tanh(g @ raw["cw2"] + raw["cb2"])
    value = g @ raw["cw3"] + raw["cb3"]
    probs = jnp.exp(logp)
    entropy = -jnp.sum(probs * logp, axis=-1)
    return logp, value, entropy


# ---------------------------------- main ----------------------------------- #

if __name__ == "__main__":
    key = jax.random.PRNGKey(0)
    k_param, k_state, k_sample = jax.random.split(key, 3)

    batch = 8
    state_dim = 32
    action_dim = 8

    raw = init_params(k_param, state_dim, action_dim)
    packed = pack_params(raw)
    state = jax.random.normal(k_state, (batch, state_dim), jnp.float32)

    # kernel forward
    logp, value, entropy = actor_critic_forward(state, packed)
    jax.block_until_ready((logp, value, entropy))

    # correctness vs f32 pure-JAX reference
    # (bf16 matmuls + bf16 tanh + bf16 output slab => loose tolerance)
    ref_logp, ref_value, ref_entropy = _reference_forward(raw, state)
    assert jnp.allclose(logp, ref_logp, atol=8e-2, rtol=8e-2)
    assert jnp.allclose(value, ref_value, atol=8e-2, rtol=8e-2)
    assert jnp.allclose(entropy, ref_entropy, atol=8e-2, rtol=8e-2)

    # act() / evaluate()
    action, action_logprob, state_val = act(packed, state, k_sample)
    jax.block_until_ready((action, action_logprob, state_val))
    logps, values, ent = evaluate(packed, state, action)
    jax.block_until_ready((logps, values, ent))

    # sanity: probs form a valid distribution (bf16 slab => ~1% row tolerance)
    probs = jnp.exp(logp)
    assert probs.shape == (batch, action_dim)
    assert values.shape == (batch, 1)
    assert jnp.allclose(jnp.sum(probs, axis=-1), 1.0, atol=2e-2)
    assert action.shape == (batch,)
    assert bool(jnp.all((action >= 0) & (action < action_dim)))

    print("KERNEL_OK")
</pallas_src>

<mosaic_0001>
module attributes {stable_mosaic.version = 11 : i64} {
  func.func @_fused_actor_critic_kernel(%arg0: i32, %arg1: memref<16x32xf32, #tpu.memory_space<vmem>>, %arg2: memref<32x128xbf16, #tpu.memory_space<vmem>>, %arg3: memref<1x128xf32, #tpu.memory_space<vmem>>, %arg4: memref<128x128xbf16, #tpu.memory_space<vmem>>, %arg5: memref<1x128xf32, #tpu.memory_space<vmem>>, %arg6: memref<128x128xbf16, #tpu.memory_space<vmem>>, %arg7: memref<1x128xf32, #tpu.memory_space<vmem>>, %arg8: memref<16x128xbf16, #tpu.memory_space<vmem>>) attributes {dimension_semantics = [#tpu.dimension_semantics<parallel>], iteration_bounds = array<i64: 1>, scalar_prefetch = 0 : i64, scratch_operands = 0 : i64, tpu.core_type = #tpu.core_type<tc>, window_params = [{transform_indices = @transform_0, window_bounds = array<i64: 16, 32>}, {pipeline_mode = #tpu.pipeline_mode<synchronous>, transform_indices = @transform_1, window_bounds = array<i64: 32, 128>}, {pipeline_mode = #tpu.pipeline_mode<synchronous>, transform_indices = @transform_2, window_bounds = array<i64: 1, 128>}, {pipeline_mode = #tpu.pipeline_mode<synchronous>, transform_indices = @transform_3, window_bounds = array<i64: 128, 128>}, {pipeline_mode = #tpu.pipeline_mode<synchronous>, transform_indices = @transform_4, window_bounds = array<i64: 1, 128>}, {pipeline_mode = #tpu.pipeline_mode<synchronous>, transform_indices = @transform_5, window_bounds = array<i64: 128, 128>}, {pipeline_mode = #tpu.pipeline_mode<synchronous>, transform_indices = @transform_6, window_bounds = array<i64: 1, 128>}, {transform_indices = @transform_7, window_bounds = array<i64: 16, 128>}]} {
    %c0 = arith.constant 0 : index
    %c0_0 = arith.constant 0 : index
    %0 = vector.load %arg1[%c0, %c0_0] : memref<16x32xf32, #tpu.memory_space<vmem>>, vector<16x32xf32>
    %1 = arith.truncf %0 : vector<16x32xf32> to vector<16x32xbf16>
    %c0_1 = arith.constant 0 : index
    %c0_2 = arith.constant 0 : index
    %2 = vector.load %arg2[%c0_1, %c0_2] : memref<32x128xbf16, #tpu.memory_space<vmem>>, vector<32x128xbf16>
    %cst = arith.constant dense<0.000000e+00> : vector<16x128xf32>
    %3 = tpu.matmul %1, %2, %cst {dimension_numbers = #tpu.dot_dimension_numbers<[1], [0], [0], [1], [0, 0, 1, 1], [], []>} : vector<16x32xbf16>, vector<32x128xbf16>, vector<16x128xf32> -> vector<16x128xf32>
    %c0_3 = arith.constant 0 : index
    %c0_4 = arith.constant 0 : index
    %4 = vector.load %arg3[%c0_3, %c0_4] : memref<1x128xf32, #tpu.memory_space<vmem>>, vector<1x128xf32>
    %5 = vector.broadcast %4 : vector<1x128xf32> to vector<16x128xf32>
    %6 = arith.addf %3, %5 : vector<16x128xf32>
    %7 = arith.truncf %6 : vector<16x128xf32> to vector<16x128xbf16>
    %8 = math.tanh %7 : vector<16x128xbf16>
    %c0_5 = arith.constant 0 : index
    %c0_6 = arith.constant 0 : index
    %9 = vector.load %arg4[%c0_5, %c0_6] : memref<128x128xbf16, #tpu.memory_space<vmem>>, vector<128x128xbf16>
    %cst_7 = arith.constant dense<0.000000e+00> : vector<16x128xf32>
    %10 = tpu.matmul %8, %9, %cst_7 {dimension_numbers = #tpu.dot_dimension_numbers<[1], [0], [0], [1], [0, 0, 1, 1], [], []>} : vector<16x128xbf16>, vector<128x128xbf16>, vector<16x128xf32> -> vector<16x128xf32>
    %c0_8 = arith.constant 0 : index
    %c0_9 = arith.constant 0 : index
    %11 = vector.load %arg5[%c0_8, %c0_9] : memref<1x128xf32, #tpu.memory_space<vmem>>, vector<1x128xf32>
    %12 = vector.broadcast %11 : vector<1x128xf32> to vector<16x128xf32>
    %13 = arith.addf %10, %12 : vector<16x128xf32>
    %14 = arith.truncf %13 : vector<16x128xf32> to vector<16x128xbf16>
    %15 = math.tanh %14 : vector<16x128xbf16>
    %c0_10 = arith.constant 0 : index
    %c0_11 = arith.constant 0 : index
    %16 = vector.load %arg6[%c0_10, %c0_11] : memref<128x128xbf16, #tpu.memory_space<vmem>>, vector<128x128xbf16>
    %cst_12 = arith.constant dense<0.000000e+00> : vector<16x128xf32>
    %17 = tpu.matmul %15, %16, %cst_12 {dimension_numbers = #tpu.dot_dimension_numbers<[1], [0], [0], [1], [0, 0, 1, 1], [], []>} : vector<16x128xbf16>, vector<128x128xbf16>, vector<16x128xf32> -> vector<16x128xf32>
    %c0_13 = arith.constant 0 : index
    %c0_14 = arith.constant 0 : index
    %18 = vector.load %arg7[%c0_13, %c0_14] : memref<1x128xf32, #tpu.memory_space<vmem>>, vector<1x128xf32>
    %19 = vector.broadcast %18 : vector<1x128xf32> to vector<16x128xf32>
    %20 = arith.addf %17, %19 : vector<16x128xf32>
    %21 = tpu.iota {dimensions = array<i32: 1>} : vector<16x128xi32>
    %c8_i32 = arith.constant 8 : i32
    %22 = vector.broadcast %c8_i32 : i32 to vector<16x128xi32>
    %23 = arith.cmpi slt, %21, %22 : vector<16x128xi32>
    %cst_15 = arith.constant -1.000000e+30 : f32
    %24 = vector.broadcast %cst_15 : f32 to vector<16x128xf32>
    %25 = arith.select %23, %20, %24 : vector<16x128xi1>, vector<16x128xf32>
    %cst_16 = arith.constant dense<0xFF800000> : vector<16xf32>
    %26 = vector.multi_reduction <maximumf>, %25, %cst_16 [1] : vector<16x128xf32> to vector<16xf32>
    %27 = vector.shape_cast %26 : vector<16xf32> to vector<16x1xf32>
    %28 = vector.broadcast %27 : vector<16x1xf32> to vector<16x128xf32>
    %29 = arith.subf %25, %28 : vector<16x128xf32>
    %30 = math.exp %29 : vector<16x128xf32>
    %cst_17 = arith.constant dense<0.000000e+00> : vector<16xf32>
    %31 = vector.multi_reduction <add>, %30, %cst_17 [1] : vector<16x128xf32> to vector<16xf32>
    %32 = vector.shape_cast %31 : vector<16xf32> to vector<16x1xf32>
    %33 = math.log %32 : vector<16x1xf32>
    %34 = arith.addf %27, %33 : vector<16x1xf32>
    %35 = vector.broadcast %34 : vector<16x1xf32> to vector<16x128xf32>
    %36 = arith.subf %25, %35 : vector<16x128xf32>
    %37 = tpu.reciprocal %32 {approx = true} : vector<16x1xf32> -> vector<16x1xf32>
    %38 = vector.broadcast %37 : vector<16x1xf32> to vector<16x128xf32>
    %39 = arith.mulf %30, %38 : vector<16x128xf32>
    %40 = arith.mulf %39, %36 : vector<16x128xf32>
    %cst_18 = arith.constant dense<0.000000e+00> : vector<16xf32>
    %41 = vector.multi_reduction <add>, %40, %cst_18 [1] : vector<16x128xf32> to vector<16xf32>
    %42 = vector.shape_cast %41 : vector<16xf32> to vector<16x1xf32>
    %cst_19 = arith.constant 0.000000e+00 : f32
    %43 = vector.broadcast %cst_19 : f32 to vector<16x1xf32>
    %44 = arith.subf %43, %42 : vector<16x1xf32>
    %45 = arith.select %23, %36, %20 : vector<16x128xi1>, vector<16x128xf32>
    %c9_i32 = arith.constant 9 : i32
    %46 = vector.broadcast %c9_i32 : i32 to vector<16x128xi32>
    %47 = arith.cmpi eq, %21, %46 : vector<16x128xi32>
    %48 = vector.shape_cast %44 : vector<16x1xf32> to vector<16x1xf32>
    %49 = vector.broadcast %48 : vector<16x1xf32> to vector<16x128xf32>
    %50 = arith.select %47, %49, %45 : vector<16x128xi1>, vector<16x128xf32>
    %51 = arith.truncf %50 : vector<16x128xf32> to vector<16x128xbf16>
    %c0_20 = arith.constant 0 : index
    %c0_21 = arith.constant 0 : index
    %52 = vector.load %arg8[%c0_20, %c0_21] : memref<16x128xbf16, #tpu.memory_space<vmem>>, vector<16x128xbf16>
    tpu.vector_store %arg8[%c0_20, %c0_21], %51 {strides = array<i32>} : memref<16x128xbf16, #tpu.memory_space<vmem>>, vector<16x128xbf16>,
    return
  }
  func.func @transform_0(%arg0: i32) -> (i32, i32) {
    %c0_i32 = arith.constant 0 : i32
    %c0_i32_0 = arith.constant 0 : i32
    return %arg0, %c0_i32 : i32, i32
  }
  func.func @transform_1(%arg0: i32) -> (i32, i32) {
    %c0_i32 = arith.constant 0 : i32
    %c0_i32_0 = arith.constant 0 : i32
    %c0_i32_1 = arith.constant 0 : i32
    return %c0_i32, %c0_i32_0 : i32, i32
  }
  func.func @transform_2(%arg0: i32) -> (i32, i32) {
    %c0_i32 = arith.constant 0 : i32
    %c0_i32_0 = arith.constant 0 : i32
    %c0_i32_1 = arith.constant 0 : i32
    return %c0_i32, %c0_i32_0 : i32, i32
  }
  func.func @transform_3(%arg0: i32) -> (i32, i32) {
    %c0_i32 = arith.constant 0 : i32
    %c0_i32_0 = arith.constant 0 : i32
    %c0_i32_1 = arith.constant 0 : i32
    return %c0_i32, %c0_i32_0 : i32, i32
  }
  func.func @transform_4(%arg0: i32) -> (i32, i32) {
    %c0_i32 = arith.constant 0 : i32
    %c0_i32_0 = arith.constant 0 : i32
    %c0_i32_1 = arith.constant 0 : i32
    return %c0_i32, %c0_i32_0 : i32, i32
  }
  func.func @transform_5(%arg0: i32) -> (i32, i32) {
    %c0_i32 = arith.constant 0 : i32
    %c0_i32_0 = arith.constant 0 : i32
    %c0_i32_1 = arith.constant 0 : i32
    return %c0_i32, %c0_i32_0 : i32, i32
  }
  func.func @transform_6(%arg0: i32) -> (i32, i32) {
    %c0_i32 = arith.constant 0 : i32
    %c0_i32_0 = arith.constant 0 : i32
    %c0_i32_1 = arith.constant 0 : i32
    return %c0_i32, %c0_i32_0 : i32, i32
  }
  func.func @transform_7(%arg0: i32) -> (i32, i32) {
    %c0_i32 = arith.constant 0 : i32
    %c0_i32_0 = arith.constant 0 : i32
    return %arg0, %c0_i32 : i32, i32
  }
}

</mosaic_0001>

<llo_original>
// kernel: _forward_jit.1
$region0: #{_forward_jit.1}
  #allocation0 [shape = 'u32[]', space=smem, size = 0x4, offset = 0x4, fixed_abs, tag = 'smem constant byte address 0x4 - core index']
  #allocation1 [shape = 'u32[144,128]{1,0:T(1,128)}', space=vmem, size = 0x12000, scoped, tag = 'internal scratch']
  %s0 = inlined_call_operand.vmem [shape: f32[16,32], index: 0, kind: input, shape index: {}]
  %s1 = inlined_call_operand.vmem [shape: bf16[32,128], index: 1, kind: input, shape index: {}]
  %s2 = inlined_call_operand.vmem [shape: f32[1,128], index: 2, kind: input, shape index: {}]
  %s3 = inlined_call_operand.hbm [shape: bf16[128,128], index: 3, kind: input, shape index: {}]
  %s4 = inlined_call_operand.vmem [shape: f32[1,128], index: 4, kind: input, shape index: {}]
  %s5 = inlined_call_operand.hbm [shape: bf16[128,128], index: 5, kind: input, shape index: {}]
  %s6 = inlined_call_operand.vmem [shape: f32[1,128], index: 6, kind: input, shape index: {}]
  %s7 = inlined_call_operand.vmem [shape: bf16[16,128], index: 7, kind: output, shape index: {}]
  %s8 = sld [smem:[#allocation0]]
  $region46: #{_forward_jit.1} parent=0
    _
  %s10 = ssub.s32 1, %s8
  %s11 = scalar_select 0, %s10, %s8
  $region1: #{_forward_jit.1} parent=0
    #allocation2 [shape = 'u8[32768]{0}', space=vmem, size = 0x8000, scoped, tag = 'input window, operand 3, single buffered']
    #allocation3 [shape = 's32[1]{0}', space=sflag, size = 0x4, scoped, tag = 'scoped memory for _forward_jit.1']
    #allocation4 [shape = 'u8[32768]{0}', space=vmem, size = 0x8000, scoped, tag = 'input window, operand 5, single buffered']
    #allocation5 [shape = 's32[1]{0}', space=sflag, size = 0x4, scoped, tag = 'scoped memory for _forward_jit.1']
    %12 = vsyncpa [#allocation3], 0
    %13 = vsyncpa [#allocation5], 0
    // Predicated region
    $region2: #{_forward_jit.1} parent=1 // pred_check
      _
    $region3: #{_forward_jit.1} parent=1 // pred_check_branch
      %15 = sbr.rel (0) target = $region5
    $region4: #{_forward_jit.1} parent=1 // pred_region
      _
    $region5: #{_forward_jit.1} parent=1 // pred_fallthru
      _
    // Predicated region
    $region6: #{_forward_jit.1} parent=1 // pred_check
      _
    $region7: #{_forward_jit.1} parent=1 // pred_check_branch
      %17 = sbr.rel (0) target = $region9
    $region8: #{_forward_jit.1} parent=1 // pred_region
      _
    $region9: #{_forward_jit.1} parent=1 // pred_fallthru
      _
    // Predicated region
    $region10: #{_forward_jit.1} parent=1 // pred_check
      _
    $region11: #{_forward_jit.1} parent=1 // pred_check_branch
      %19 = sbr.rel (0) target = $region13
    $region12: #{_forward_jit.1} parent=1 // pred_region
      _
    $region13: #{_forward_jit.1} parent=1 // pred_fallthru
      _
    // Predicated region
    $region14: #{_forward_jit.1} parent=1 // pred_check
      _
    $region15: #{_forward_jit.1} parent=1 // pred_check_branch
      %21 = sbr.rel (0) target = $region17
    $region16: #{_forward_jit.1} parent=1 // pred_region
      %s23 = ssub.s32 1024, 1024
      %24 = vsyncadd [#allocation3], %s23
      %s25 = sshll.u32 [#allocation2], 4
      %s26 = int_to_ptr.vmem [resolvable:$true] %s25
      %31 = dma.hbm_to_vmem [thread:$0]  %s3, 1024, %s26, [#allocation3], 64, 64, 4
    $region17: #{_forward_jit.1} parent=1 // pred_fallthru
      _
    // Predicated region
    $region18: #{_forward_jit.1} parent=1 // pred_check
      _
    $region19: #{_forward_jit.1} parent=1 // pred_check_branch
      %33 = sbr.rel (0) target = $region21
    $region20: #{_forward_jit.1} parent=1 // pred_region
      _
    $region21: #{_forward_jit.1} parent=1 // pred_fallthru
      _
    // Predicated region
    $region22: #{_forward_jit.1} parent=1 // pred_check
      _
    $region23: #{_forward_jit.1} parent=1 // pred_check_branch
      %35 = sbr.rel (0) target = $region25
    $region24: #{_forward_jit.1} parent=1 // pred_region
      %s37 = ssub.s32 1024, 1024
      %38 = vsyncadd [#allocation5], %s37
      %s39 = sshll.u32 [#allocation4], 4
      %s40 = int_to_ptr.vmem [resolvable:$true] %s39
      %45 = dma.hbm_to_vmem [thread:$0]  %s5, 1024, %s40, [#allocation5], 64, 64, 4
    $region25: #{_forward_jit.1} parent=1 // pred_fallthru
      _
    // Predicated region
    $region26: #{_forward_jit.1} parent=1 // pred_check
      _
    $region27: #{_forward_jit.1} parent=1 // pred_check_branch
      %47 = sbr.rel (0) target = $region29
    $region28: #{_forward_jit.1} parent=1 // pred_region
      _
    $region29: #{_forward_jit.1} parent=1 // pred_fallthru
      _
    // Predicated region
    $region30: #{_forward_jit.1} parent=1 // pred_check
      _
    $region31: #{_forward_jit.1} parent=1 // pred_check_branch
      %49 = sbr.rel (0) target = $region33
    $region32: #{_forward_jit.1} parent=1 // pred_region
      %50 = dma.done [#allocation3], 1024
    $region33: #{_forward_jit.1} parent=1 // pred_fallthru
      _
    // Predicated region
    $region34: #{_forward_jit.1} parent=1 // pred_check
      _
    $region35: #{_forward_jit.1} parent=1 // pred_check_branch
      %52 = sbr.rel (0) target = $region37
    $region36: #{_forward_jit.1} parent=1 // pred_region
      %53 = dma.done [#allocation5], 1024
    $region37: #{_forward_jit.1} parent=1 // pred_fallthru
      _
    %v55 = vld [vmem:[%s0] sm:$0xff]
    %v56 = vld [vmem:[%s0 + $0x8] sm:$0xff]
    %v57 = vpack.c.bf16 %v56, %v55
    %v58 = vld [vmem:[%s1] sm:$0xf]
    %v59 = vld [vmem:[%s1 + $0x4] sm:$0xf]
    %v60 = vld [vmem:[%s1 + $0x8] sm:$0xf]
    %v61 = vld [vmem:[%s1 + $0xc] sm:$0xf]
    %v62 = vld [vmem:[%s2] sm:$0x1]
    %v64 = vlaneseq
    %v65 = vshrl.u32 %v64, 7
    %v66 = vsub.s32 0, %v65
    %v67 = vrot.slane %v62, %v66
    %v73 = vunpack.c.l.b16 %v58
    %v74 = vunpack.c.l.b16 %v59
    %v75 = vunpack.c.l.b16 %v60
    %v76 = vunpack.c.l.b16 %v61
    %v77 = vpack.c.b16 %v74, %v73
    %v78 = vpack.c.b16 %v76, %v75
    %vm81 = vcmask 261120
    %v83 = vsel %vm81, %v57, 0
    %85 = vmatprep.subr.bf16.mxu0 0
    %86 = vmatpush1.bf16.msra.mxu0 0
    %87 = vmatprep.subr.bf16.mxu0 0
    %88 = vmatpush1.bf16.msra.mxu0 0
    %89 = vmatprep.subr.bf16.mxu0 0
    %90 = vmatpush1.bf16.msra.mxu0 0
    %91 = vmatprep.subr.bf16.mxu0 0
    %92 = vmatpush1.bf16.msra.mxu0 0
    %93 = vmatprep.subr.bf16.mxu0 0
    %94 = vmatpush1.bf16.msra.mxu0 0
    %95 = vmatprep.subr.bf16.mxu0 0
    %96 = vmatpush1.bf16.msra.mxu0 0
    %97 = vmatprep.subr.bf16.mxu0 0
    %98 = vmatpush1.bf16.msra.mxu0 %v78
    %99 = vmatprep.subr.bf16.mxu0 0
    %100 = vmatpush1.bf16.msra.mxu0 %v77
    %101 = vmatprep.subr.bf16.mxu0 0
    %102 = vmatpush2.bf16.msra.mxu0 0
    %103 = vmatprep.subr.bf16.mxu0 0
    %104 = vmatpush2.bf16.msra.mxu0 0
    %105 = vmatprep.subr.bf16.mxu0 0
    %106 = vmatpush2.bf16.msra.mxu0 0
    %107 = vmatprep.subr.bf16.mxu0 0
    %108 = vmatpush2.bf16.msra.mxu0 0
    %109 = vmatprep.subr.bf16.mxu0 0
    %110 = vmatpush2.bf16.msra.mxu0 0
    %111 = vmatprep.subr.bf16.mxu0 0
    %112 = vmatpush2.bf16.msra.mxu0 0
    %113 = vmatprep.subr.bf16.mxu0 0
    %114 = vmatpush2.bf16.msra.mxu0 0
    %115 = vmatprep.subr.bf16.mxu0 0
    %116 = vmatpush2.bf16.msra.mxu0 0
    %117 = vmatprep.mubr.bf16.mxu0 0
    %118 = vmatmul.mubr.bf16.gmra.mxu0 %v83
    %v119 = vpop.f32.mrf.mxu0
    %v120 = vadd.f32 %v67, %v119
    %v121 = vpop.f32.mrf.mxu0
    %v122 = vpop.f32.mrf.mxu0
    %v123 = vadd.f32 %v67, %v122
    %v124 = vpop.f32.mrf.mxu0
    %125 = vdwg.mxu0
    %v126 = vpack.c.bf16 %v123, %v120
    %v127 = vtanh.bf16.pop %v126
    %v128 = vld [vmem:[#allocation2] sm:$0xf]
    %v129 = vld [vmem:[#allocation2 + $0x4] sm:$0xf]
    %v130 = vld [vmem:[#allocation2 + $0x8] sm:$0xf]
    %v131 = vld [vmem:[#allocation2 + $0xc] sm:$0xf]
    %v132 = vld [vmem:[#allocation2 + $0x10] sm:$0xf]
    %v133 = vld [vmem:[#allocation2 + $0x14] sm:$0xf]
    %v134 = vld [vmem:[#allocation2 + $0x18] sm:$0xf]
    %v135 = vld [vmem:[#allocation2 + $0x1c] sm:$0xf]
    %v136 = vld [vmem:[#allocation2 + $0x20] sm:$0xf]
    %v137 = vld [vmem:[#allocation2 + $0x24] sm:$0xf]
    %v138 = vld [vmem:[#allocation2 + $0x28] sm:$0xf]
    %v139 = vld [vmem:[#allocation2 + $0x2c] sm:$0xf]
    %v140 = vld [vmem:[#allocation2 + $0x30] sm:$0xf]
    %v141 = vld [vmem:[#allocation2 + $0x34] sm:$0xf]
    %v142 = vld [vmem:[#allocation2 + $0x38] sm:$0xf]
    %v143 = vld [vmem:[#allocation2 + $0x3c] sm:$0xf]
    %v144 = vld [vmem:[%s4] sm:$0x1]
    %v146 = vlaneseq
    %v147 = vshrl.u32 %v146, 7
    %v148 = vsub.s32 0, %v147
    %v149 = vrot.slane %v144, %v148
    %v167 = vunpack.c.l.b16 %v128
    %v168 = vunpack.c.l.b16 %v129
    %v169 = vunpack.c.l.b16 %v130
    %v170 = vunpack.c.l.b16 %v131
    %v171 = vunpack.c.l.b16 %v132
    %v172 = vunpack.c.l.b16 %v133
    %v173 = vunpack.c.l.b16 %v134
    %v174 = vunpack.c.l.b16 %v135
    %v175 = vunpack.c.l.b16 %v136
    %v176 = vunpack.c.l.b16 %v137
    %v177 = vunpack.c.l.b16 %v138
    %v178 = vunpack.c.l.b16 %v139
    %v179 = vunpack.c.l.b16 %v140
    %v180 = vunpack.c.l.b16 %v141
    %v181 = vunpack.c.l.b16 %v142
    %v182 = vunpack.c.l.b16 %v143
    %v183 = vpack.c.b16 %v168, %v167
    %v184 = vpack.c.b16 %v170, %v169
    %v185 = vpack.c.b16 %v172, %v171
    %v186 = vpack.c.b16 %v174, %v173
    %v187 = vpack.c.b16 %v176, %v175
    %v188 = vpack.c.b16 %v178, %v177
    %v189 = vpack.c.b16 %v180, %v179
    %v190 = vpack.c.b16 %v182, %v181
    %199 = vmatprep.subr.bf16.mxu0 0
    %200 = vmatpush1.bf16.msra.mxu0 %v190
    %201 = vmatprep.subr.bf16.mxu0 0
    %202 = vmatpush1.bf16.msra.mxu0 %v189
    %203 = vmatprep.subr.bf16.mxu0 0
    %204 = vmatpush1.bf16.msra.mxu0 %v188
    %205 = vmatprep.subr.bf16.mxu0 0
    %206 = vmatpush1.bf16.msra.mxu0 %v187
    %207 = vmatprep.subr.bf16.mxu0 0
    %208 = vmatpush1.bf16.msra.mxu0 %v186
    %209 = vmatprep.subr.bf16.mxu0 0
    %210 = vmatpush1.bf16.msra.mxu0 %v185
    %211 = vmatprep.subr.bf16.mxu0 0
    %212 = vmatpush1.bf16.msra.mxu0 %v184
    %213 = vmatprep.subr.bf16.mxu0 0
    %214 = vmatpush1.bf16.msra.mxu0 %v183
    %215 = vmatprep.subr.bf16.mxu0 0
    %216 = vmatpush2.bf16.msra.mxu0 0
    %217 = vmatprep.subr.bf16.mxu0 0
    %218 = vmatpush2.bf16.msra.mxu0 0
    %219 = vmatprep.subr.bf16.mxu0 0
    %220 = vmatpush2.bf16.msra.mxu0 0
    %221 = vmatprep.subr.bf16.mxu0 0
    %222 = vmatpush2.bf16.msra.mxu0 0
    %223 = vmatprep.subr.bf16.mxu0 0
    %224 = vmatpush2.bf16.msra.mxu0 0
    %225 = vmatprep.subr.bf16.mxu0 0
    %226 = vmatpush2.bf16.msra.mxu0 0
    %227 = vmatprep.subr.bf16.mxu0 0
    %228 = vmatpush2.bf16.msra.mxu0 0
    %229 = vmatprep.subr.bf16.mxu0 0
    %230 = vmatpush2.bf16.msra.mxu0 0
    %231 = vmatprep.mubr.bf16.mxu0 0
    %232 = vmatmul.mubr.bf16.gmra.mxu0 %v127
    %v233 = vpop.f32.mrf.mxu0
    %v234 = vadd.f32 %v149, %v233
    %v235 = vpop.f32.mrf.mxu0
    %v236 = vpop.f32.mrf.mxu0
    %v237 = vadd.f32 %v149, %v236
    %v238 = vpop.f32.mrf.mxu0
    %239 = vdwg.mxu0
    %v240 = vpack.c.bf16 %v237, %v234
    %v241 = vtanh.bf16.pop %v240
    %v242 = vld [vmem:[#allocation4] sm:$0xf]
    %v243 = vld [vmem:[#allocation4 + $0x4] sm:$0xf]
    %v244 = vld [vmem:[#allocation4 + $0x8] sm:$0xf]
    %v245 = vld [vmem:[#allocation4 + $0xc] sm:$0xf]
    %v246 = vld [vmem:[#allocation4 + $0x10] sm:$0xf]
    %v247 = vld [vmem:[#allocation4 + $0x14] sm:$0xf]
    %v248 = vld [vmem:[#allocation4 + $0x18] sm:$0xf]
    %v249 = vld [vmem:[#allocation4 + $0x1c] sm:$0xf]
    %v250 = vld [vmem:[#allocation4 + $0x20] sm:$0xf]
    %v251 = vld [vmem:[#allocation4 + $0x24] sm:$0xf]
    %v252 = vld [vmem:[#allocation4 + $0x28] sm:$0xf]
    %v253 = vld [vmem:[#allocation4 + $0x2c] sm:$0xf]
    %v254 = vld [vmem:[#allocation4 + $0x30] sm:$0xf]
    %v255 = vld [vmem:[#allocation4 + $0x34] sm:$0xf]
    %v256 = vld [vmem:[#allocation4 + $0x38] sm:$0xf]
    %v257 = vld [vmem:[#allocation4 + $0x3c] sm:$0xf]
    %v258 = vld [vmem:[%s6] sm:$0x1]
    %v260 = vlaneseq
    %v261 = vshrl.u32 %v260, 7
    %v262 = vsub.s32 0, %v261
    %v263 = vrot.slane %v258, %v262
    %v281 = vunpack.c.l.b16 %v242
    %v282 = vunpack.c.l.b16 %v243
    %v283 = vunpack.c.l.b16 %v244
    %v284 = vunpack.c.l.b16 %v245
    %v285 = vunpack.c.l.b16 %v246
    %v286 = vunpack.c.l.b16 %v247
    %v287 = vunpack.c.l.b16 %v248
    %v288 = vunpack.c.l.b16 %v249
    %v289 = vunpack.c.l.b16 %v250
    %v290 = vunpack.c.l.b16 %v251
    %v291 = vunpack.c.l.b16 %v252
    %v292 = vunpack.c.l.b16 %v253
    %v293 = vunpack.c.l.b16 %v254
    %v294 = vunpack.c.l.b16 %v255
    %v295 = vunpack.c.l.b16 %v256
    %v296 = vunpack.c.l.b16 %v257
    %v297 = vpack.c.b16 %v282, %v281
    %v298 = vpack.c.b16 %v284, %v283
    %v299 = vpack.c.b16 %v286, %v285
    %v300 = vpack.c.b16 %v288, %v287
    %v301 = vpack.c.b16 %v290, %v289
    %v302 = vpack.c.b16 %v292, %v291
    %v303 = vpack.c.b16 %v294, %v293
    %v304 = vpack.c.b16 %v296, %v295
    %313 = vmatprep.subr.bf16.mxu0 0
    %314 = vmatpush1.bf16.msra.mxu0 %v304
    %315 = vmatprep.subr.bf16.mxu0 0
    %316 = vmatpush1.bf16.msra.mxu0 %v303
    %317 = vmatprep.subr.bf16.mxu0 0
    %318 = vmatpush1.bf16.msra.mxu0 %v302
    %319 = vmatprep.subr.bf16.mxu0 0
    %320 = vmatpush1.bf16.msra.mxu0 %v301
    %321 = vmatprep.subr.bf16.mxu0 0
    %322 = vmatpush1.bf16.msra.mxu0 %v300
    %323 = vmatprep.subr.bf16.mxu0 0
    %324 = vmatpush1.bf16.msra.mxu0 %v299
    %325 = vmatprep.subr.bf16.mxu0 0
    %326 = vmatpush1.bf16.msra.mxu0 %v298
    %327 = vmatprep.subr.bf16.mxu0 0
    %328 = vmatpush1.bf16.msra.mxu0 %v297
    %329 = vmatprep.subr.bf16.mxu0 0
    %330 = vmatpush2.bf16.msra.mxu0 0
    %331 = vmatprep.subr.bf16.mxu0 0
    %332 = vmatpush2.bf16.msra.mxu0 0
    %333 = vmatprep.subr.bf16.mxu0 0
    %334 = vmatpush2.bf16.msra.mxu0 0
    %335 = vmatprep.subr.bf16.mxu0 0
    %336 = vmatpush2.bf16.msra.mxu0 0
    %337 = vmatprep.subr.bf16.mxu0 0
    %338 = vmatpush2.bf16.msra.mxu0 0
    %339 = vmatprep.subr.bf16.mxu0 0
    %340 = vmatpush2.bf16.msra.mxu0 0
    %341 = vmatprep.subr.bf16.mxu0 0
    %342 = vmatpush2.bf16.msra.mxu0 0
    %343 = vmatprep.subr.bf16.mxu0 0
    %344 = vmatpush2.bf16.msra.mxu0 0
    %345 = vmatprep.mubr.bf16.mxu0 0
    %346 = vmatmul.mubr.bf16.gmra.mxu0 %v241
    %v347 = vpop.f32.mrf.mxu0
    %v348 = vadd.f32 %v263, %v347
    %v349 = vpop.f32.mrf.mxu0
    %v350 = vpop.f32.mrf.mxu0
    %v351 = vadd.f32 %v263, %v350
    %v352 = vpop.f32.mrf.mxu0
    %353 = vdwg.mxu0
    %v354 = vlaneseq
    %v355 = vand.u32 %v354, 127
    %vm356 = vcmp.lt.s32.totalorder %v355, 8
    %v357 = vsel %vm356, %v348, -1e+30
    %v358 = vsel %vm356, %v351, -1e+30
    %359 = vmax.xlane.f32.xlu0 %v357
    %v360 = vpop.xlane.xlu0 %359
    %361 = vmax.xlane.f32.xlu0 %v358
    %v362 = vpop.xlane.xlu0 %361
    %v363 = vsub.f32 %v357, %v360
    %v364 = vsub.f32 %v358, %v362
    %v365 = vmul.f32 %v363, 1.442695
    %v366 = vpow.pop %v365
    %v367 = vmul.f32 %v364, 1.442695
    %v368 = vpow.pop %v367
    %369 = vadd.xlane.f32.xlu0 %v366
    %v370 = vpop.xlane.xlu0 %369
    %371 = vadd.xlane.f32.xlu0 %v368
    %v372 = vpop.xlane.xlu0 %371
    %v373 = vlog2.pop %v370
    %v374 = vmul.f32 %v373, 0.6931472
    %v375 = vlog2.pop %v372
    %v376 = vmul.f32 %v375, 0.6931472
    %v377 = vadd.f32 %v360, %v374
    %v378 = vadd.f32 %v362, %v376
    %v379 = vsub.f32 %v357, %v377
    %v380 = vsub.f32 %v358, %v378
    %v381 = vrcp.pop %v370
    %v382 = vrcp.pop %v372
    %v383 = vmul.f32 %v366, %v381
    %v384 = vmul.f32 %v368, %v382
    %v385 = vmul.f32 %v383, %v379
    %v386 = vmul.f32 %v384, %v380
    %387 = vadd.xlane.f32.xlu0 %v385
    %v388 = vpop.xlane.xlu0 %387
    %389 = vadd.xlane.f32.xlu0 %v386
    %v390 = vpop.xlane.xlu0 %389
    %v391 = vsub.f32 0.0, %v388
    %v392 = vsub.f32 0.0, %v390
    %v393 = vsel %vm356, %v379, %v348
    %v394 = vsel %vm356, %v380, %v351
    %vm395 = vcmp.eq.s32.totalorder %v355, 9
    %v396 = vsel %vm395, %v391, %v393
    %v397 = vsel %vm395, %v392, %v394
    %v398 = vpack.c.bf16 %v397, %v396
    %v400 = vunpack.c.l.b16 %v398
    %v401 = vunpack.c.h.b16 %v398
    %v402 = vpack.c.b16 %v400, %v400
    %v403 = vpack.c.b16 %v401, %v401
    %406 = vst [vmem:[%s7] sm:$0xf] %v402
    %407 = vst [vmem:[%s7 + $0x4] sm:$0xf] %v403
    // Predicated region
    $region38: #{_forward_jit.1} parent=1 // pred_check
      _
    $region39: #{_forward_jit.1} parent=1 // pred_check_branch
      %409 = sbr.rel (0) target = $region41
    $region40: #{_forward_jit.1} parent=1 // pred_region
      _
    $region41: #{_forward_jit.1} parent=1 // pred_fallthru
      _
    // Predicated region
    $region42: #{_forward_jit.1} parent=1 // pred_check
      _
    $region43: #{_forward_jit.1} parent=1 // pred_check_branch
      %411 = sbr.rel (0) target = $region45
    $region44: #{_forward_jit.1} parent=1 // pred_region
      _
    $region45: #{_forward_jit.1} parent=1 // pred_fallthru
      _
    %412 = vsyncpa [#allocation3], 1
    %413 = vsyncpa [#allocation5], 1

</llo_original>
